<compile_context>
chip_gen: v5e
topology: v5e:2x2
jax: 0.10.0
libtpu: 0.0.40
codegen_flags: <defaults>
</compile_context>

<pallas_src>
import math

import jax
import jax.numpy as jnp
from jax.experimental import pallas as pl
from jax.experimental.pallas import tpu as pltpu


# ---------------------------------------------------------------------------
# small helpers
# ---------------------------------------------------------------------------

def _round_up(x, m):
    return ((x + m - 1) // m) * m


def _pad_axis(x, axis, new_size):
    pad = new_size - x.shape[axis]
    if pad <= 0:
        return x
    cfg = [(0, 0)] * x.ndim
    cfg[axis] = (0, pad)
    return jnp.pad(x, cfg)


def _device_info():
    """(vmem_bytes_per_core, tensorcores_per_chip, has_bf16_valu)."""
    kind = ""
    try:
        kind = jax.devices()[0].device_kind.lower()
    except Exception:
        pass
    is_v7 = "v7" in kind
    vmem_bytes = 64 * 1024 * 1024 if is_v7 else 128 * 1024 * 1024
    try:
        vmem_bytes = int(pltpu.get_tpu_info().vmem_capacity_bytes)
        if is_v7:
            vmem_bytes = min(vmem_bytes, 64 * 1024 * 1024)  # per-TC on v7x
    except Exception:
        pass
    num_tc = 2 if is_v7 else 1
    has_bf16_valu = ("v6" in kind) or is_v7
    return vmem_bytes, num_tc, has_bf16_valu


def _spec(shape, index_map, buffers=None):
    """BlockSpec with an optional pipeline depth; graceful fallback if this
    JAX build does not accept `pipeline_mode`."""
    if buffers is None:
        return pl.BlockSpec(shape, index_map)
    try:
        return pl.BlockSpec(shape, index_map, pipeline_mode=pl.Buffered(buffers))
    except Exception:
        return pl.BlockSpec(shape, index_map)


def _vmem_footprint(tb, S, H, X0, A, in_isz, out_isz, ep_isz):
    """Bytes live in VMEM for one grid step (blocks + weights + intermediates)."""
    hid = 2 * tb * S * H * in_isz              # double-buffered hidden block
    x0b = 2 * tb * X0 * in_isz                 # double-buffered x0 block
    outb = 2 * tb * (H + S) * out_isz          # double-buffered output blocks
    wts = (H * A + X0 * A) * in_isz + 2 * A * 4   # single-buffered weights + bh/V (f32)
    inter = tb * S * A * (4 + ep_isz)          # ah (f32) + relu/V product (epilogue dtype)
    inter += tb * S * H * in_isz               # prob * h product for the weighted sum
    inter += tb * (4 * A + 4 * S + 8 * H)      # a0, scores/prob, f32 out accumulator
    return hid + x0b + outb + wts + inter


def _pick_tb(B, S, H, X0, A, in_isz, out_isz, ep_isz, vmem_bytes, num_tc):
    """Sublane-aligned batch block that fits the accounted VMEM footprint."""
    SUB = 8
    if B <= SUB:
        return B                               # tiny batch: single step, no padding games
    budget = (3 * vmem_bytes) // 4             # ~96 MiB on v5e/v6e, ~48 MiB on v7x
    # ~1024-row blocks on 128-MiB chips, ~512 on v7x (HBM-roofline sweet spot).
    max_rows = 512 if num_tc > 1 else 1024
    tb = _round_up(max(1, max_rows // max(S, 1)), SUB)
    tb = min(tb, _round_up(B, SUB))
    while tb > SUB and _vmem_footprint(tb, S, H, X0, A, in_isz, out_isz, ep_isz) > budget:
        tb = _round_up(tb // 2, SUB)
    grid = pl.cdiv(B, tb)
    if num_tc > 1 and grid > 1 and grid % num_tc != 0:
        grid += 1                              # even step count keeps both v7x TCs busy
    tb = min(tb, _round_up(pl.cdiv(B, grid), SUB))   # minimize batch padding
    return max(tb, SUB)


# ---------------------------------------------------------------------------
# kernel
# ---------------------------------------------------------------------------

def _make_kernel(ep_dtype):
    def kernel(h_ref, x0_ref, wh_ref, bh_ref, w0_ref, v_ref, out_ref, prob_ref):
        TB, S, H = h_ref.shape
        A = wh_ref.shape[1]

        h = h_ref[...]                                               # [TB, S, H]

        # Wh projection: one MXU pass over all TB*S rows, f32 accumulation.
        ah = jnp.dot(h.reshape(TB * S, H), wh_ref[...],
                     preferred_element_type=jnp.float32).reshape(TB, S, A)

        # x0 projection with the Wh bias folded in (bias add is O(A) per row).
        a0 = jnp.dot(x0_ref[...], w0_ref[...],
                     preferred_element_type=jnp.float32) + bh_ref[...]   # [TB, A] f32

        # relu(Ah + A0) and the V reduction.  On bf16-VALU chips this 3-op
        # elementwise chain over the [TB, S, A] intermediate runs in bf16
        # (2x vreg packing); the reduction over A accumulates in f32.
        w = jnp.maximum(ah.astype(ep_dtype) + a0.astype(ep_dtype)[:, None, :], 0.0)
        scores = jnp.sum(w * v_ref[...].astype(ep_dtype), axis=2,
                         dtype=jnp.float32)                          # [TB, S]

        # softmax over seq (lengths=None path), f32 throughout; exact divide
        # on the [TB, 1] denominator so the exposed probs sum to 1.
        m = jnp.max(scores, axis=1, keepdims=True)
        e = jnp.exp(scores - m)
        denom = jnp.sum(e, axis=1, keepdims=True)
        prob = e * (1.0 / denom)                                     # [TB, S] f32

        # TODO(synk): `lengths` masked-softmax path not implemented
        # (lengths=None only); dropout assumed p=0 (identity / eval mode).

        # output[b, :] = sum_s prob[b, s] * h[b, s, :]
        # VPU multiply in the input dtype + sublane reduce over S with f32
        # accumulation; avoids a second [TB, S, H] f32 copy of h and TB tiny
        # M=1 MXU matmuls.
        out = jnp.sum(prob.astype(h.dtype)[:, :, None] * h, axis=1,
                      dtype=jnp.float32)                             # [TB, H]

        out_ref[...] = out.astype(out_ref.dtype)
        prob_ref[...] = prob.astype(prob_ref.dtype)

    return kernel


# ---------------------------------------------------------------------------
# wrapper
# ---------------------------------------------------------------------------

def x1_self_attention(hidden_states, x0_hidden_states, wh, bh, w0, v,
                      tb=None, input_buffers=None, epilogue_dtype=None):
    """hidden_states [B,S,H], x0 [B,X0], wh [H,A], bh [1,A], w0 [X0,A], v [1,A].

    The dtype of `hidden_states` is the MXU operand dtype (feed bf16 for
    throughput mode -- no wrapper-side cast of the large tensor is done here).
    Returns (output [B,H], attention_probs [B,S]) in that dtype.
    """
    B, S, H = hidden_states.shape
    X0 = x0_hidden_states.shape[1]
    A = wh.shape[1]
    in_dtype = hidden_states.dtype
    out_dtype = in_dtype

    vmem_bytes, num_tc, has_bf16_valu = _device_info()

    # Small operands follow hidden_states' dtype (no-op casts when they match);
    # bias / V stay f32 (they are added / reduced against f32 accumulators).
    x0_hidden_states = x0_hidden_states.astype(in_dtype)
    wh = wh.astype(in_dtype)
    w0 = w0.astype(in_dtype)
    bh = bh.astype(jnp.float32)
    v = v.astype(jnp.float32)

    # Zero-pad A to a lane-dense multiple of 128 (weights only; semantically a
    # no-op because relu(0 + 0) * 0 == 0).
    Ap = _round_up(A, 128)
    if Ap != A:
        wh = _pad_axis(wh, 1, Ap)
        w0 = _pad_axis(w0, 1, Ap)
        bh = _pad_axis(bh, 1, Ap)
        v = _pad_axis(v, 1, Ap)

    if epilogue_dtype is None:
        epilogue_dtype = (jnp.bfloat16
                          if (has_bf16_valu and in_dtype == jnp.bfloat16)
                          else jnp.float32)

    in_isz = jnp.dtype(in_dtype).itemsize
    out_isz = jnp.dtype(out_dtype).itemsize
    ep_isz = jnp.dtype(epilogue_dtype).itemsize

    if tb is None:
        tb = _pick_tb(B, S, H, X0, Ap, in_isz, out_isz, ep_isz, vmem_bytes, num_tc)
    tb = min(tb, _round_up(B, 8)) if B >= 8 else min(tb, B)

    grid_b = int(pl.cdiv(B, tb))
    B_pad = grid_b * tb
    if B_pad != B:
        # Ragged batch: zero-pad (padded rows produce a uniform softmax over
        # zero scores and a zero output; both are sliced off below).
        hidden_states = _pad_axis(hidden_states, 0, B_pad)
        x0_hidden_states = _pad_axis(x0_hidden_states, 0, B_pad)

    in_specs = [
        # batch-blocked operands (default double-buffer, optionally deeper)
        _spec((tb, S, H), lambda b: (b, 0, 0), buffers=input_buffers),
        _spec((tb, X0), lambda b: (b, 0), buffers=input_buffers),
        # constant weights: single-buffered, never re-DMA'd
        _spec((H, Ap), lambda b: (0, 0), buffers=1),
        _spec((1, Ap), lambda b: (0, 0), buffers=1),
        _spec((X0, Ap), lambda b: (0, 0), buffers=1),
        _spec((1, Ap), lambda b: (0, 0), buffers=1),
    ]
    out_specs = [
        pl.BlockSpec((tb, H), lambda b: (b, 0)),     # output
        pl.BlockSpec((tb, S), lambda b: (b, 0)),     # attention_probs
    ]

    grid_spec = pltpu.PrefetchScalarGridSpec(
        num_scalar_prefetch=0,
        grid=(grid_b,),
        in_specs=in_specs,
        out_specs=out_specs,
    )

    # VMEM limit: sized from the accounted footprint (blocks + weights +
    # intermediates), capped well below physical capacity (headroom for
    # compiler scratch, never the full 64 MiB on v7x).
    footprint = _vmem_footprint(tb, S, H, X0, Ap, in_isz, out_isz, ep_isz)
    vmem_limit = int(min(0.85 * vmem_bytes, max(32 * 1024 * 1024, 2 * footprint)))

    out, prob = pl.pallas_call(
        _make_kernel(epilogue_dtype),
        out_shape=(
            jax.ShapeDtypeStruct((B_pad, H), out_dtype),
            jax.ShapeDtypeStruct((B_pad, S), out_dtype),
        ),
        grid_spec=grid_spec,
        compiler_params=pltpu.CompilerParams(
            dimension_semantics=("parallel",),
            vmem_limit_bytes=vmem_limit),
    )(hidden_states, x0_hidden_states, wh, bh, w0, v)

    if B_pad != B:
        out, prob = out[:B], prob[:B]
    return out, prob


# ---------------------------------------------------------------------------
# reference + smoke test
# ---------------------------------------------------------------------------

def _reference(hidden_states, x0_hidden_states, wh, bh, w0, v):
    hp = jax.lax.Precision.HIGHEST
    ah = jnp.einsum("bsh,ha->bsa", hidden_states, wh, precision=hp) + bh
    a0 = jnp.einsum("bx,xa->ba", x0_hidden_states, w0, precision=hp)[:, None, :]
    w = jnp.maximum(ah + a0, 0.0)
    scores = jnp.einsum("bsa,a->bs", w, v[0], precision=hp)
    prob = jax.nn.softmax(scores, axis=1)
    out = jnp.einsum("bs,bsh->bh", prob, hidden_states, precision=hp)
    return out, prob


if __name__ == "__main__":
    # small shapes consistent with the module's forward
    B, S, H, X0, A = 8, 8, 32, 16, 32

    key = jax.random.PRNGKey(0)
    k_h, k_x0, k_wh, k_w0, k_v = jax.random.split(key, 5)

    hidden_states = jax.random.normal(k_h, (B, S, H), dtype=jnp.float32)
    x0_hidden_states = jax.random.normal(k_x0, (B, X0), dtype=jnp.float32)

    # deterministic parameter init mirroring reset_parameters()
    w_bound = math.sqrt(6.0 / (H + A))
    w0_bound = math.sqrt(6.0 / (X0 + A))
    wh = jax.random.uniform(k_wh, (H, A), jnp.float32, -w_bound, w_bound)     # att_Wh.weight^T
    bh = jnp.zeros((1, A), jnp.float32)                                        # att_Wh.bias
    w0 = jax.random.uniform(k_w0, (X0, A), jnp.float32, -w0_bound, w0_bound)   # att_W0.weight^T
    v = 0.1 * jax.random.normal(k_v, (1, A), jnp.float32)                      # att_V.weight

    ref_out, ref_prob = _reference(hidden_states, x0_hidden_states, wh, bh, w0, v)

    # f32 path (exact softmax divide; probs sum to 1).
    out, prob = x1_self_attention(hidden_states, x0_hidden_states, wh, bh, w0, v)
    out, prob = jax.block_until_ready(out), jax.block_until_ready(prob)
    assert jnp.allclose(out, ref_out, atol=2e-3, rtol=2e-3)
    assert jnp.allclose(prob, ref_prob, atol=2e-3, rtol=2e-3)

    # bf16 throughput mode: the PRODUCER feeds bf16 operands (no wrapper-side
    # cast pass over hidden_states); MXU/reductions accumulate in f32, the
    # relu/V epilogue runs in bf16 on bf16-VALU chips.
    out_bf, prob_bf = x1_self_attention(
        hidden_states.astype(jnp.bfloat16),
        x0_hidden_states.astype(jnp.bfloat16),
        wh.astype(jnp.bfloat16), bh, w0.astype(jnp.bfloat16), v)
    out_bf, prob_bf = jax.block_until_ready(out_bf), jax.block_until_ready(prob_bf)
    assert jnp.allclose(out_bf.astype(jnp.float32), ref_out, atol=1e-1, rtol=1e-1)
    assert jnp.allclose(prob_bf.astype(jnp.float32), ref_prob, atol=1e-1, rtol=1e-1)

    print("KERNEL_OK")
</pallas_src>

<mosaic_0001>
module attributes {stable_mosaic.version = 11 : i64} {
  func.func @kernel(%arg0: i32, %arg1: memref<8x8x32xf32, #tpu.memory_space<vmem>>, %arg2: memref<8x16xf32, #tpu.memory_space<vmem>>, %arg3: memref<32x128xf32, #tpu.memory_space<vmem>>, %arg4: memref<1x128xf32, #tpu.memory_space<vmem>>, %arg5: memref<16x128xf32, #tpu.memory_space<vmem>>, %arg6: memref<1x128xf32, #tpu.memory_space<vmem>>, %arg7: memref<8x32xf32, #tpu.memory_space<vmem>>, %arg8: memref<8x8xf32, #tpu.memory_space<vmem>>) attributes {dimension_semantics = [#tpu.dimension_semantics<parallel>], iteration_bounds = array<i64: 1>, scalar_prefetch = 0 : i64, scratch_operands = 0 : i64, tpu.core_type = #tpu.core_type<tc>, window_params = [{transform_indices = @transform_0, window_bounds = array<i64: 8, 8, 32>}, {transform_indices = @transform_1, window_bounds = array<i64: 8, 16>}, {pipeline_mode = #tpu.pipeline_mode<synchronous>, transform_indices = @transform_2, window_bounds = array<i64: 32, 128>}, {pipeline_mode = #tpu.pipeline_mode<synchronous>, transform_indices = @transform_3, window_bounds = array<i64: 1, 128>}, {pipeline_mode = #tpu.pipeline_mode<synchronous>, transform_indices = @transform_4, window_bounds = array<i64: 16, 128>}, {pipeline_mode = #tpu.pipeline_mode<synchronous>, transform_indices = @transform_5, window_bounds = array<i64: 1, 128>}, {transform_indices = @transform_6, window_bounds = array<i64: 8, 32>}, {transform_indices = @transform_7, window_bounds = array<i64: 8, 8>}]} {
    %c0 = arith.constant 0 : index
    %c0_0 = arith.constant 0 : index
    %c0_1 = arith.constant 0 : index
    %0 = vector.load %arg1[%c0, %c0_0, %c0_1] : memref<8x8x32xf32, #tpu.memory_space<vmem>>, vector<8x8x32xf32>
    %1 = vector.shape_cast %0 : vector<8x8x32xf32> to vector<64x32xf32>
    %c0_2 = arith.constant 0 : index
    %c0_3 = arith.constant 0 : index
    %2 = vector.load %arg3[%c0_2, %c0_3] : memref<32x128xf32, #tpu.memory_space<vmem>>, vector<32x128xf32>
    %cst = arith.constant dense<0.000000e+00> : vector<64x128xf32>
    %3 = tpu.matmul %1, %2, %cst {dimension_numbers = #tpu.dot_dimension_numbers<[1], [0], [0], [1], [0, 0, 1, 1], [], []>} : vector<64x32xf32>, vector<32x128xf32>, vector<64x128xf32> -> vector<64x128xf32>
    %4 = vector.shape_cast %3 : vector<64x128xf32> to vector<8x8x128xf32>
    %c0_4 = arith.constant 0 : index
    %c0_5 = arith.constant 0 : index
    %5 = vector.load %arg2[%c0_4, %c0_5] : memref<8x16xf32, #tpu.memory_space<vmem>>, vector<8x16xf32>
    %c0_6 = arith.constant 0 : index
    %c0_7 = arith.constant 0 : index
    %6 = vector.load %arg5[%c0_6, %c0_7] : memref<16x128xf32, #tpu.memory_space<vmem>>, vector<16x128xf32>
    %cst_8 = arith.constant dense<0.000000e+00> : vector<8x128xf32>
    %7 = tpu.matmul %5, %6, %cst_8 {dimension_numbers = #tpu.dot_dimension_numbers<[1], [0], [0], [1], [0, 0, 1, 1], [], []>} : vector<8x16xf32>, vector<16x128xf32>, vector<8x128xf32> -> vector<8x128xf32>
    %c0_9 = arith.constant 0 : index
    %c0_10 = arith.constant 0 : index
    %8 = vector.load %arg4[%c0_9, %c0_10] : memref<1x128xf32, #tpu.memory_space<vmem>>, vector<1x128xf32>
    %9 = vector.broadcast %8 : vector<1x128xf32> to vector<8x128xf32>
    %10 = arith.addf %7, %9 : vector<8x128xf32>
    %11 = vector.shape_cast %10 : vector<8x128xf32> to vector<8x1x128xf32>
    %12 = vector.broadcast %11 : vector<8x1x128xf32> to vector<8x8x128xf32>
    %13 = arith.addf %4, %12 : vector<8x8x128xf32>
    %cst_11 = arith.constant 0.000000e+00 : f32
    %14 = vector.broadcast %cst_11 : f32 to vector<8x8x128xf32>
    %15 = arith.maximumf %13, %14 : vector<8x8x128xf32>
    %c0_12 = arith.constant 0 : index
    %c0_13 = arith.constant 0 : index
    %16 = vector.load %arg6[%c0_12, %c0_13] : memref<1x128xf32, #tpu.memory_space<vmem>>, vector<1x128xf32>
    %17 = vector.shape_cast %16 : vector<1x128xf32> to vector<1x1x128xf32>
    %18 = vector.broadcast %17 : vector<1x1x128xf32> to vector<8x8x128xf32>
    %19 = arith.mulf %15, %18 : vector<8x8x128xf32>
    %cst_14 = arith.constant dense<0.000000e+00> : vector<8x8xf32>
    %20 = vector.multi_reduction <add>, %19, %cst_14 [2] : vector<8x8x128xf32> to vector<8x8xf32>
    %cst_15 = arith.constant dense<0xFF800000> : vector<8xf32>
    %21 = vector.multi_reduction <maximumf>, %20, %cst_15 [1] : vector<8x8xf32> to vector<8xf32>
    %22 = vector.shape_cast %21 : vector<8xf32> to vector<8x1xf32>
    %23 = vector.broadcast %22 : vector<8x1xf32> to vector<8x8xf32>
    %24 = arith.subf %20, %23 : vector<8x8xf32>
    %25 = math.exp %24 : vector<8x8xf32>
    %cst_16 = arith.constant dense<0.000000e+00> : vector<8xf32>
    %26 = vector.multi_reduction <add>, %25, %cst_16 [1] : vector<8x8xf32> to vector<8xf32>
    %27 = vector.shape_cast %26 : vector<8xf32> to vector<8x1xf32>
    %cst_17 = arith.constant 1.000000e+00 : f32
    %28 = vector.broadcast %cst_17 : f32 to vector<8x1xf32>
    %29 = arith.divf %28, %27 : vector<8x1xf32>
    %30 = vector.broadcast %29 : vector<8x1xf32> to vector<8x8xf32>
    %31 = arith.mulf %25, %30 : vector<8x8xf32>
    %32 = vector.shape_cast %31 : vector<8x8xf32> to vector<8x8x1xf32>
    %33 = vector.broadcast %32 : vector<8x8x1xf32> to vector<8x8x32xf32>
    %34 = arith.mulf %33, %0 : vector<8x8x32xf32>
    %cst_18 = arith.constant dense<0.000000e+00> : vector<8x32xf32>
    %35 = vector.multi_reduction <add>, %34, %cst_18 [1] : vector<8x8x32xf32> to vector<8x32xf32>
    %c0_19 = arith.constant 0 : index
    %c0_20 = arith.constant 0 : index
    %36 = vector.load %arg7[%c0_19, %c0_20] : memref<8x32xf32, #tpu.memory_space<vmem>>, vector<8x32xf32>
    tpu.vector_store %arg7[%c0_19, %c0_20], %35 {strides = array<i32>} : memref<8x32xf32, #tpu.memory_space<vmem>>, vector<8x32xf32>,
    %c0_21 = arith.constant 0 : index
    %c0_22 = arith.constant 0 : index
    %37 = vector.load %arg8[%c0_21, %c0_22] : memref<8x8xf32, #tpu.memory_space<vmem>>, vector<8x8xf32>
    tpu.vector_store %arg8[%c0_21, %c0_22], %31 {strides = array<i32>} : memref<8x8xf32, #tpu.memory_space<vmem>>, vector<8x8xf32>,
    return
  }
  func.func @transform_0(%arg0: i32) -> (i32, i32, i32) {
    %c0_i32 = arith.constant 0 : i32
    %c0_i32_0 = arith.constant 0 : i32
    %c0_i32_1 = arith.constant 0 : i32
    return %arg0, %c0_i32, %c0_i32_0 : i32, i32, i32
  }
  func.func @transform_1(%arg0: i32) -> (i32, i32) {
    %c0_i32 = arith.constant 0 : i32
    %c0_i32_0 = arith.constant 0 : i32
    return %arg0, %c0_i32 : i32, i32
  }
  func.func @transform_2(%arg0: i32) -> (i32, i32) {
    %c0_i32 = arith.constant 0 : i32
    %c0_i32_0 = arith.constant 0 : i32
    %c0_i32_1 = arith.constant 0 : i32
    return %c0_i32, %c0_i32_0 : i32, i32
  }
  func.func @transform_3(%arg0: i32) -> (i32, i32) {
    %c0_i32 = arith.constant 0 : i32
    %c0_i32_0 = arith.constant 0 : i32
    %c0_i32_1 = arith.constant 0 : i32
    return %c0_i32, %c0_i32_0 : i32, i32
  }
  func.func @transform_4(%arg0: i32) -> (i32, i32) {
    %c0_i32 = arith.constant 0 : i32
    %c0_i32_0 = arith.constant 0 : i32
    %c0_i32_1 = arith.constant 0 : i32
    return %c0_i32, %c0_i32_0 : i32, i32
  }
  func.func @transform_5(%arg0: i32) -> (i32, i32) {
    %c0_i32 = arith.constant 0 : i32
    %c0_i32_0 = arith.constant 0 : i32
    %c0_i32_1 = arith.constant 0 : i32
    return %c0_i32, %c0_i32_0 : i32, i32
  }
  func.func @transform_6(%arg0: i32) -> (i32, i32) {
    %c0_i32 = arith.constant 0 : i32
    %c0_i32_0 = arith.constant 0 : i32
    return %arg0, %c0_i32 : i32, i32
  }
  func.func @transform_7(%arg0: i32) -> (i32, i32) {
    %c0_i32 = arith.constant 0 : i32
    %c0_i32_0 = arith.constant 0 : i32
    return %arg0, %c0_i32 : i32, i32
  }
}

</mosaic_0001>

<llo_original>
// kernel: tpu_custom_call.1
$region0: #{tpu_custom_call.1}
  #allocation0 [shape = 'u32[]', space=smem, size = 0x4, offset = 0x4, fixed_abs, tag = 'smem constant byte address 0x4 - core index']
  #allocation1 [shape = 'u32[72,128]{1,0:T(1,128)}', space=vmem, size = 0x9000, scoped, tag = 'internal scratch']
  %s0 = inlined_call_operand.hbm [shape: f32[8,8,32], index: 0, kind: input, shape index: {}]
  %s1 = inlined_call_operand.hbm [shape: f32[8,16], index: 1, kind: input, shape index: {}]
  %s2 = inlined_call_operand.hbm [shape: f32[32,128], index: 2, kind: input, shape index: {}]
  %s3 = inlined_call_operand.vmem [shape: f32[1,128], index: 3, kind: input, shape index: {}]
  %s4 = inlined_call_operand.hbm [shape: f32[16,128], index: 4, kind: input, shape index: {}]
  %s5 = inlined_call_operand.vmem [shape: f32[1,128], index: 5, kind: input, shape index: {}]
  %s6 = inlined_call_operand.hbm [shape: f32[8,32], index: 6, kind: output, shape index: {0}]
  %s7 = inlined_call_operand.hbm [shape: f32[8,8], index: 7, kind: output, shape index: {1}]
  %8 = xla_tuple %s6, %s7
  %s9 = sld [smem:[#allocation0]]
  $region58: #{tpu_custom_call.1} parent=0
    _
  %s11 = ssub.s32 1, %s9
  %s12 = scalar_select 0, %s11, %s9
  $region1: #{tpu_custom_call.1} parent=0
    #allocation2 [shape = 'u8[32768]{0}', space=vmem, size = 0x8000, scoped, tag = 'input window, operand 0, single buffered']
    #allocation3 [shape = 's32[1]{0}', space=sflag, size = 0x4, scoped, tag = 'scoped memory for tpu_custom_call.1']
    #allocation4 [shape = 's32[1]{0}', space=sflag, size = 0x4, scoped, tag = 'scoped memory for tpu_custom_call.1']
    #allocation5 [shape = 'u8[4096]{0}', space=vmem, size = 0x1000, scoped, tag = 'input window, operand 1, single buffered']
    #allocation6 [shape = 's32[1]{0}', space=sflag, size = 0x4, scoped, tag = 'scoped memory for tpu_custom_call.1']
    #allocation7 [shape = 'u8[16384]{0}', space=vmem, size = 0x4000, scoped, tag = 'input window, operand 2, single buffered']
    #allocation8 [shape = 'u8[8192]{0}', space=vmem, size = 0x2000, scoped, tag = 'input window, operand 4, single buffered']
    #allocation9 [shape = 's32[1]{0}', space=sflag, size = 0x4, scoped, tag = 'scoped memory for tpu_custom_call.1']
    #allocation10 [shape = 'u8[4096]{0}', space=vmem, size = 0x1000, scoped, tag = 'output window, operand 0, single buffered']
    #allocation11 [shape = 'u8[4096]{0}', space=vmem, size = 0x1000, scoped, tag = 'output window, operand 1, single buffered']
    #allocation12 [shape = 's32[1]{0}', space=sflag, size = 0x4, scoped, tag = 'scoped memory for tpu_custom_call.1']
    %13 = vsyncpa [#allocation3], 0
    %14 = vsyncpa [#allocation6], 0
    %15 = vsyncpa [#allocation9], 0
    %16 = vsyncpa [#allocation4], 0
    %17 = vsyncpa [#allocation12], 0
    // Predicated region
    $region2: #{tpu_custom_call.1} parent=1 // pred_check
      _
    $region3: #{tpu_custom_call.1} parent=1 // pred_check_branch
      %19 = sbr.rel (0) target = $region5
    $region4: #{tpu_custom_call.1} parent=1 // pred_region
      %21 = vsyncadd [#allocation3], 0
      %s22 = sshll.u32 %s0, 4
      %s23 = int_to_ptr.hbm [resolvable:$true] %s22
      %s24 = sshll.u32 [#allocation2], 4
      %s25 = int_to_ptr.vmem [resolvable:$true] %s24
      %30 = dma.hbm_to_vmem [thread:$0]  %s23, 1024, %s25, [#allocation3], 128, 128, 8
    $region5: #{tpu_custom_call.1} parent=1 // pred_fallthru
      _
    // Predicated region
    $region6: #{tpu_custom_call.1} parent=1 // pred_check
      _
    $region7: #{tpu_custom_call.1} parent=1 // pred_check_branch
      %32 = sbr.rel (0) target = $region9
    $region8: #{tpu_custom_call.1} parent=1 // pred_region
      %34 = vsyncadd [#allocation6], 0
      %s36 = sshll.u32 %s1, 4
      %s37 = int_to_ptr.hbm [resolvable:$true] %s36
      %s38 = sshll.u32 [#allocation5], 4
      %s39 = int_to_ptr.vmem [resolvable:$true] %s38
      %41 = dma.hbm_to_vmem [thread:$0]  %s37, 128, %s39, [#allocation6]
    $region9: #{tpu_custom_call.1} parent=1 // pred_fallthru
      _
    // Predicated region
    $region10: #{tpu_custom_call.1} parent=1 // pred_check
      _
    $region11: #{tpu_custom_call.1} parent=1 // pred_check_branch
      %43 = sbr.rel (0) target = $region13
    $region12: #{tpu_custom_call.1} parent=1 // pred_region
      %45 = vsyncadd [#allocation6], 0
      %s46 = sshll.u32 %s2, 4
      %s47 = int_to_ptr.hbm [resolvable:$true] %s46
      %s48 = sshll.u32 [#allocation7], 4
      %s49 = int_to_ptr.vmem [resolvable:$true] %s48
      %54 = dma.hbm_to_vmem [thread:$0]  %s47, 512, %s49, [#allocation6], 128, 128, 8
    $region13: #{tpu_custom_call.1} parent=1 // pred_fallthru
      _
    // Predicated region
    $region14: #{tpu_custom_call.1} parent=1 // pred_check
      _
    $region15: #{tpu_custom_call.1} parent=1 // pred_check_branch
      %56 = sbr.rel (0) target = $region17
    $region16: #{tpu_custom_call.1} parent=1 // pred_region
      _
    $region17: #{tpu_custom_call.1} parent=1 // pred_fallthru
      _
    // Predicated region
    $region18: #{tpu_custom_call.1} parent=1 // pred_check
      _
    $region19: #{tpu_custom_call.1} parent=1 // pred_check_branch
      %58 = sbr.rel (0) target = $region21
    $region20: #{tpu_custom_call.1} parent=1 // pred_region
      %60 = vsyncadd [#allocation9], 0
      %s61 = sshll.u32 %s4, 4
      %s62 = int_to_ptr.hbm [resolvable:$true] %s61
      %s63 = sshll.u32 [#allocation8], 4
      %s64 = int_to_ptr.vmem [resolvable:$true] %s63
      %69 = dma.hbm_to_vmem [thread:$0]  %s62, 256, %s64, [#allocation9], 128, 128, 8
    $region21: #{tpu_custom_call.1} parent=1 // pred_fallthru
      _
    // Predicated region
    $region22: #{tpu_custom_call.1} parent=1 // pred_check
      _
    $region23: #{tpu_custom_call.1} parent=1 // pred_check_branch
      %71 = sbr.rel (0) target = $region25
    $region24: #{tpu_custom_call.1} parent=1 // pred_region
      _
    $region25: #{tpu_custom_call.1} parent=1 // pred_fallthru
      _
    // Predicated region
    $region26: #{tpu_custom_call.1} parent=1 // pred_check
      _
    $region27: #{tpu_custom_call.1} parent=1 // pred_check_branch
      %73 = sbr.rel (0) target = $region29
    $region28: #{tpu_custom_call.1} parent=1 // pred_region
      %75 = dma.done [#allocation3], 1024
    $region29: #{tpu_custom_call.1} parent=1 // pred_fallthru
      _
    // Predicated region
    $region30: #{tpu_custom_call.1} parent=1 // pred_check
      _
    $region31: #{tpu_custom_call.1} parent=1 // pred_check_branch
      %77 = sbr.rel (0) target = $region33
    $region32: #{tpu_custom_call.1} parent=1 // pred_region
      %79 = dma.done [#allocation6], 128
    $region33: #{tpu_custom_call.1} parent=1 // pred_fallthru
      _
    // Predicated region
    $region34: #{tpu_custom_call.1} parent=1 // pred_check
      _
    $region35: #{tpu_custom_call.1} parent=1 // pred_check_branch
      %81 = sbr.rel (0) target = $region37
    $region36: #{tpu_custom_call.1} parent=1 // pred_region
      %83 = dma.done [#allocation6], 512
    $region37: #{tpu_custom_call.1} parent=1 // pred_fallthru
      _
    // Predicated region
    $region38: #{tpu_custom_call.1} parent=1 // pred_check
      _
    $region39: #{tpu_custom_call.1} parent=1 // pred_check_branch
      %85 = sbr.rel (0) target = $region41
    $region40: #{tpu_custom_call.1} parent=1 // pred_region
      %87 = dma.done [#allocation9], 256
    $region41: #{tpu_custom_call.1} parent=1 // pred_fallthru
      _
    %v88 = vld [vmem:[#allocation2] sm:$0xff]
    %v89 = vld [vmem:[#allocation2 + $0x8] sm:$0xff]
    %v90 = vld [vmem:[#allocation2 + $0x10] sm:$0xff]
    %v91 = vld [vmem:[#allocation2 + $0x18] sm:$0xff]
    %v92 = vld [vmem:[#allocation2 + $0x20] sm:$0xff]
    %v93 = vld [vmem:[#allocation2 + $0x28] sm:$0xff]
    %v94 = vld [vmem:[#allocation2 + $0x30] sm:$0xff]
    %v95 = vld [vmem:[#allocation2 + $0x38] sm:$0xff]
    %v96 = vld [vmem:[#allocation7] sm:$0xff]
    %v97 = vld [vmem:[#allocation7 + $0x8] sm:$0xff]
    %v98 = vld [vmem:[#allocation7 + $0x10] sm:$0xff]
    %v99 = vld [vmem:[#allocation7 + $0x18] sm:$0xff]
    %vm100 = vcmask 261120
    %v102 = vsel %vm100, %v88, 0
    %v105 = vsel %vm100, %v89, 0
    %v108 = vsel %vm100, %v90, 0
    %v111 = vsel %vm100, %v91, 0
    %v114 = vsel %vm100, %v92, 0
    %v117 = vsel %vm100, %v93, 0
    %v120 = vsel %vm100, %v94, 0
    %v123 = vsel %vm100, %v95, 0
    %125 = vmatpush.msra.mxu0 0.0
    %126 = vmatpush.msra.mxu0 0.0
    %127 = vmatpush.msra.mxu0 0.0
    %128 = vmatpush.msra.mxu0 0.0
    %129 = vmatpush.msra.mxu0 0.0
    %130 = vmatpush.msra.mxu0 0.0
    %131 = vmatpush.msra.mxu0 0.0
    %132 = vmatpush.msra.mxu0 0.0
    %133 = vmatpush.msra.mxu0 0.0
    %134 = vmatpush.msra.mxu0 0.0
    %135 = vmatpush.msra.mxu0 0.0
    %136 = vmatpush.msra.mxu0 0.0
    %137 = vmatpush.msra.mxu0 %v99
    %138 = vmatpush.msra.mxu0 %v98
    %139 = vmatpush.msra.mxu0 %v97
    %140 = vmatpush.msra.mxu0 %v96
    %141 = vmatmul.f32.gmra.mxu0 %v102
    %v142 = vpop.f32.mrf.mxu0
    %v143 = vadd.f32 0.0, %v142
    %144 = vmatmul.f32.gmra.mxu0 %v105
    %v145 = vpop.f32.mrf.mxu0
    %v146 = vadd.f32 0.0, %v145
    %147 = vmatmul.f32.gmra.mxu0 %v108
    %v148 = vpop.f32.mrf.mxu0
    %v149 = vadd.f32 0.0, %v148
    %150 = vmatmul.f32.gmra.mxu0 %v111
    %v151 = vpop.f32.mrf.mxu0
    %v152 = vadd.f32 0.0, %v151
    %153 = vmatmul.f32.gmra.mxu0 %v114
    %v154 = vpop.f32.mrf.mxu0
    %v155 = vadd.f32 0.0, %v154
    %156 = vmatmul.f32.gmra.mxu0 %v117
    %v157 = vpop.f32.mrf.mxu0
    %v158 = vadd.f32 0.0, %v157
    %159 = vmatmul.f32.gmra.mxu0 %v120
    %v160 = vpop.f32.mrf.mxu0
    %v161 = vadd.f32 0.0, %v160
    %162 = vmatmul.f32.gmra.mxu0 %v123
    %v163 = vpop.f32.mrf.mxu0
    %v164 = vadd.f32 0.0, %v163
    %165 = vdwg.mxu0
    %v166 = vld [vmem:[#allocation5] sm:$0xff]
    %v167 = vld [vmem:[#allocation8] sm:$0xff]
    %v168 = vld [vmem:[#allocation8 + $0x8] sm:$0xff]
    %v169 = vld [vmem:[%s3] sm:$0x1]
    %v171 = vperm.slane %v169, 0
    %vm173 = vcmask 130048
    %v175 = vsel %vm173, %v166, 0
    %177 = vmatpush.msra.mxu0 0.0
    %178 = vmatpush.msra.mxu0 0.0
    %179 = vmatpush.msra.mxu0 0.0
    %180 = vmatpush.msra.mxu0 0.0
    %181 = vmatpush.msra.mxu0 0.0
    %182 = vmatpush.msra.mxu0 0.0
    %183 = vmatpush.msra.mxu0 0.0
    %184 = vmatpush.msra.mxu0 0.0
    %185 = vmatpush.msra.mxu0 0.0
    %186 = vmatpush.msra.mxu0 0.0
    %187 = vmatpush.msra.mxu0 0.0
    %188 = vmatpush.msra.mxu0 0.0
    %189 = vmatpush.msra.mxu0 0.0
    %190 = vmatpush.msra.mxu0 0.0
    %191 = vmatpush.msra.mxu0 %v168
    %192 = vmatpush.msra.mxu0 %v167
    %193 = vmatmul.f32.gmra.mxu0 %v175
    %v194 = vpop.f32.mrf.mxu0
    %v195 = vadd.f32 %v171, %v194
    %196 = vdwg.mxu0
    %v198 = vrot.slane %v195, 1
    %v199 = vrot.slane %v195, 2
    %v200 = vrot.slane %v195, 3
    %v201 = vrot.slane %v195, 4
    %v202 = vrot.slane %v195, 5
    %v203 = vrot.slane %v195, 6
    %v204 = vrot.slane %v195, 7
    %v205 = vperm.slane %v195, 0
    %v206 = vperm.slane %v198, 0
    %v207 = vperm.slane %v199, 0
    %v208 = vperm.slane %v200, 0
    %v209 = vperm.slane %v201, 0
    %v210 = vperm.slane %v202, 0
    %v211 = vperm.slane %v203, 0
    %v212 = vperm.slane %v204, 0
    %v221 = vadd.f32 %v143, %v205
    %v222 = vadd.f32 %v146, %v206
    %v223 = vadd.f32 %v149, %v207
    %v224 = vadd.f32 %v152, %v208
    %v225 = vadd.f32 %v155, %v209
    %v226 = vadd.f32 %v158, %v210
    %v227 = vadd.f32 %v161, %v211
    %v228 = vadd.f32 %v164, %v212
    %v229 = vmax.f32 %v221, 0.0
    %v230 = vmax.f32 %v222, 0.0
    %v231 = vmax.f32 %v223, 0.0
    %v232 = vmax.f32 %v224, 0.0
    %v233 = vmax.f32 %v225, 0.0
    %v234 = vmax.f32 %v226, 0.0
    %v235 = vmax.f32 %v227, 0.0
    %v236 = vmax.f32 %v228, 0.0
    %v237 = vld [vmem:[%s5] sm:$0x1]
    %v239 = vperm.slane %v237, 0
    %v241 = vmul.f32 %v229, %v239
    %v242 = vmul.f32 %v230, %v239
    %v243 = vmul.f32 %v231, %v239
    %v244 = vmul.f32 %v232, %v239
    %v245 = vmul.f32 %v233, %v239
    %v246 = vmul.f32 %v234, %v239
    %v247 = vmul.f32 %v235, %v239
    %v248 = vmul.f32 %v236, %v239
    %249 = vadd.xlane.f32.xlu0 %v241
    %v250 = vpop.xlane.xlu0 %249
    %251 = vadd.xlane.f32.xlu0 %v242
    %v252 = vpop.xlane.xlu0 %251
    %253 = vadd.xlane.f32.xlu0 %v243
    %v254 = vpop.xlane.xlu0 %253
    %255 = vadd.xlane.f32.xlu0 %v244
    %v256 = vpop.xlane.xlu0 %255
    %257 = vadd.xlane.f32.xlu0 %v245
    %v258 = vpop.xlane.xlu0 %257
    %259 = vadd.xlane.f32.xlu0 %v246
    %v260 = vpop.xlane.xlu0 %259
    %261 = vadd.xlane.f32.xlu0 %v247
    %v262 = vpop.xlane.xlu0 %261
    %263 = vadd.xlane.f32.xlu0 %v248
    %v264 = vpop.xlane.xlu0 %263
    %v273 = vlaneseq
    %v274 = vand.u32 %v273, 127
    %v275 = vperm.slane %v250, %v274
    %v276 = vperm.slane %v252, %v274
    %v277 = vperm.slane %v254, %v274
    %v278 = vperm.slane %v256, %v274
    %v279 = vperm.slane %v258, %v274
    %v280 = vperm.slane %v260, %v274
    %v281 = vperm.slane %v262, %v274
    %v282 = vperm.slane %v264, %v274
    %vm283 = vcmask 1041409
    %v284 = vsel %vm283, %v276, %v275
    %vm285 = vcmask 1042434
    %v286 = vsel %vm285, %v277, %v284
    %vm287 = vcmask 1043459
    %v288 = vsel %vm287, %v278, %v286
    %vm289 = vcmask 1044484
    %v290 = vsel %vm289, %v279, %v288
    %vm291 = vcmask 1045509
    %v292 = vsel %vm291, %v280, %v290
    %vm293 = vcmask 1046534
    %v294 = vsel %vm293, %v281, %v292
    %vm295 = vcmask 1047559
    %v296 = vsel %vm295, %v282, %v294
    %vm298 = vcmask 64512
    %v299 = vsel %vm298, %v296, -inf
    %300 = vmax.xlane.f32.xlu0 %v299
    %v301 = vpop.xlane.xlu0 %300
    %v303 = vperm.slane %v301, 0
    %v304 = vperm.slane %v301, 1
    %v305 = vperm.slane %v301, 2
    %v306 = vperm.slane %v301, 3
    %v307 = vperm.slane %v301, 4
    %v308 = vperm.slane %v301, 5
    %v309 = vperm.slane %v301, 6
    %v310 = vperm.slane %v301, 7
    %v319 = vsub.f32 %v250, %v303
    %v320 = vsub.f32 %v252, %v304
    %v321 = vsub.f32 %v254, %v305
    %v322 = vsub.f32 %v256, %v306
    %v323 = vsub.f32 %v258, %v307
    %v324 = vsub.f32 %v260, %v308
    %v325 = vsub.f32 %v262, %v309
    %v326 = vsub.f32 %v264, %v310
    %v327 = vmul.f32 %v319, 1.442695
    %v328 = vpow.pop %v327
    %v329 = vmul.f32 %v320, 1.442695
    %v330 = vpow.pop %v329
    %v331 = vmul.f32 %v321, 1.442695
    %v332 = vpow.pop %v331
    %v333 = vmul.f32 %v322, 1.442695
    %v334 = vpow.pop %v333
    %v335 = vmul.f32 %v323, 1.442695
    %v336 = vpow.pop %v335
    %v337 = vmul.f32 %v324, 1.442695
    %v338 = vpow.pop %v337
    %v339 = vmul.f32 %v325, 1.442695
    %v340 = vpow.pop %v339
    %v341 = vmul.f32 %v326, 1.442695
    %v342 = vpow.pop %v341
    %351 = vset.pattern.permute.xlu0 0
    %352 = vperm.xlu0 %351, %v328
    %v353 = vpop.permute.xlu0 %352
    %354 = vset.pattern.permute.xlu0 0
    %355 = vperm.xlu0 %354, %v330
    %v356 = vpop.permute.xlu0 %355
    %357 = vset.pattern.permute.xlu0 0
    %358 = vperm.xlu0 %357, %v332
    %v359 = vpop.permute.xlu0 %358
    %360 = vset.pattern.permute.xlu0 0
    %361 = vperm.xlu0 %360, %v334
    %v362 = vpop.permute.xlu0 %361
    %363 = vset.pattern.permute.xlu0 0
    %364 = vperm.xlu0 %363, %v336
    %v365 = vpop.permute.xlu0 %364
    %366 = vset.pattern.permute.xlu0 0
    %367 = vperm.xlu0 %366, %v338
    %v368 = vpop.permute.xlu0 %367
    %369 = vset.pattern.permute.xlu0 0
    %370 = vperm.xlu0 %369, %v340
    %v371 = vpop.permute.xlu0 %370
    %372 = vset.pattern.permute.xlu0 0
    %373 = vperm.xlu0 %372, %v342
    %v374 = vpop.permute.xlu0 %373
    %v375 = vperm.slane %v353, %v274
    %v376 = vperm.slane %v356, %v274
    %v377 = vperm.slane %v359, %v274
    %v378 = vperm.slane %v362, %v274
    %v379 = vperm.slane %v365, %v274
    %v380 = vperm.slane %v368, %v274
    %v381 = vperm.slane %v371, %v274
    %v382 = vperm.slane %v374, %v274
    %v383 = vsel %vm283, %v376, %v375
    %v384 = vsel %vm285, %v377, %v383
    %v385 = vsel %vm287, %v378, %v384
    %v386 = vsel %vm289, %v379, %v385
    %v387 = vsel %vm291, %v380, %v386
    %v388 = vsel %vm293, %v381, %v387
    %v389 = vsel %vm295, %v382, %v388
    %v391 = vsel %vm298, %v389, 0.0
    %392 = vadd.xlane.f32.xlu0 %v391
    %v393 = vpop.xlane.xlu0 %392
    %v394 = vrcp.pop %v393
    %v395 = vmul.f32 %v393, %v394
    %v396 = vsub.f32 1.0, %v395
    %v397 = vmul.f32 %v394, %v396
    %v398 = vadd.f32 %v394, %v397
    %vm399 = vweird.f32 %v393
    %vm400 = vweird.f32 %v394
    %vm401 = vmor %vm399, %vm400
    %v402 = vsel %vm401, %v394, %v398
    %v403 = vand.u32 2147483647, %v393
    %vm404 = vcmp.eq.f32.partialorder %v403, 8.507059e+37
    %v405 = vand.u32 %v393, 2147483648
    %v406 = vor.u32 1.1754944e-38, %v405
    %v407 = vsel %vm404, %v406, %v402
    %v408 = vmul.f32 1.0, %v407
    %v410 = vperm.slane %v408, 0
    %v411 = vperm.slane %v408, 1
    %v412 = vperm.slane %v408, 2
    %v413 = vperm.slane %v408, 3
    %v414 = vperm.slane %v408, 4
    %v415 = vperm.slane %v408, 5
    %v416 = vperm.slane %v408, 6
    %v417 = vperm.slane %v408, 7
    %v426 = vmul.f32 %v328, %v410
    %v427 = vmul.f32 %v330, %v411
    %v428 = vmul.f32 %v332, %v412
    %v429 = vmul.f32 %v334, %v413
    %v430 = vmul.f32 %v336, %v414
    %v431 = vmul.f32 %v338, %v415
    %v432 = vmul.f32 %v340, %v416
    %v433 = vmul.f32 %v342, %v417
    %435 = vset.pattern.permute.xlu0 0
    %436 = vperm.xlu0 %435, %v426
    %v437 = vpop.permute.xlu0 %436
    %440 = vset.pattern.permute.xlu0 0
    %441 = vperm.xlu0 %440, %v427
    %v442 = vpop.permute.xlu0 %441
    %445 = vset.pattern.permute.xlu0 0
    %446 = vperm.xlu0 %445, %v428
    %v447 = vpop.permute.xlu0 %446
    %450 = vset.pattern.permute.xlu0 0
    %451 = vperm.xlu0 %450, %v429
    %v452 = vpop.permute.xlu0 %451
    %455 = vset.pattern.permute.xlu0 0
    %456 = vperm.xlu0 %455, %v430
    %v457 = vpop.permute.xlu0 %456
    %460 = vset.pattern.permute.xlu0 0
    %461 = vperm.xlu0 %460, %v431
    %v462 = vpop.permute.xlu0 %461
    %465 = vset.pattern.permute.xlu0 0
    %466 = vperm.xlu0 %465, %v432
    %v467 = vpop.permute.xlu0 %466
    %470 = vset.pattern.permute.xlu0 0
    %471 = vperm.xlu0 %470, %v433
    %v472 = vpop.permute.xlu0 %471
    %v474 = vmul.f32 %v437, %v88
    %v475 = vmul.f32 %v442, %v89
    %v476 = vmul.f32 %v447, %v90
    %v477 = vmul.f32 %v452, %v91
    %v478 = vmul.f32 %v457, %v92
    %v479 = vmul.f32 %v462, %v93
    %v480 = vmul.f32 %v467, %v94
    %v481 = vmul.f32 %v472, %v95
    %v482 = vsel %vm100, %v474, 0.0
    %v483 = vrot.slane %v482, 4
    %v484 = vadd.f32 %v482, %v483
    %v485 = vrot.slane %v484, 2
    %v486 = vadd.f32 %v484, %v485
    %v487 = vrot.slane %v486, 1
    %v488 = vadd.f32 %v486, %v487
    %v489 = vsel %vm100, %v475, 0.0
    %v490 = vrot.slane %v489, 4
    %v491 = vadd.f32 %v489, %v490
    %v492 = vrot.slane %v491, 2
    %v493 = vadd.f32 %v491, %v492
    %v494 = vrot.slane %v493, 1
    %v495 = vadd.f32 %v493, %v494
    %v496 = vsel %vm100, %v476, 0.0
    %v497 = vrot.slane %v496, 4
    %v498 = vadd.f32 %v496, %v497
    %v499 = vrot.slane %v498, 2
    %v500 = vadd.f32 %v498, %v499
    %v501 = vrot.slane %v500, 1
    %v502 = vadd.f32 %v500, %v501
    %v503 = vsel %vm100, %v477, 0.0
    %v504 = vrot.slane %v503, 4
    %v505 = vadd.f32 %v503, %v504
    %v506 = vrot.slane %v505, 2
    %v507 = vadd.f32 %v505, %v506
    %v508 = vrot.slane %v507, 1
    %v509 = vadd.f32 %v507, %v508
    %v510 = vsel %vm100, %v478, 0.0
    %v511 = vrot.slane %v510, 4
    %v512 = vadd.f32 %v510, %v511
    %v513 = vrot.slane %v512, 2
    %v514 = vadd.f32 %v512, %v513
    %v515 = vrot.slane %v514, 1
    %v516 = vadd.f32 %v514, %v515
    %v517 = vsel %vm100, %v479, 0.0
    %v518 = vrot.slane %v517, 4
    %v519 = vadd.f32 %v517, %v518
    %v520 = vrot.slane %v519, 2
    %v521 = vadd.f32 %v519, %v520
    %v522 = vrot.slane %v521, 1
    %v523 = vadd.f32 %v521, %v522
    %v524 = vsel %vm100, %v480, 0.0
    %v525 = vrot.slane %v524, 4
    %v526 = vadd.f32 %v524, %v525
    %v527 = vrot.slane %v526, 2
    %v528 = vadd.f32 %v526, %v527
    %v529 = vrot.slane %v528, 1
    %v530 = vadd.f32 %v528, %v529
    %v531 = vsel %vm100, %v481, 0.0
    %v532 = vrot.slane %v531, 4
    %v533 = vadd.f32 %v531, %v532
    %v534 = vrot.slane %v533, 2
    %v535 = vadd.f32 %v533, %v534
    %v536 = vrot.slane %v535, 1
    %v537 = vadd.f32 %v535, %v536
    %v546 = vsel %vm283, %v495, %v488
    %v547 = vsel %vm285, %v502, %v546
    %v548 = vsel %vm287, %v509, %v547
    %v549 = vsel %vm289, %v516, %v548
    %v550 = vsel %vm291, %v523, %v549
    %v551 = vsel %vm293, %v530, %v550
    %v552 = vsel %vm295, %v537, %v551
    %554 = vst.msk [vmem:[#allocation10] sm:$0xff] %vm100, %v552
    %v555 = vperm.slane %v437, %v274
    %v556 = vperm.slane %v442, %v274
    %v557 = vperm.slane %v447, %v274
    %v558 = vperm.slane %v452, %v274
    %v559 = vperm.slane %v457, %v274
    %v560 = vperm.slane %v462, %v274
    %v561 = vperm.slane %v467, %v274
    %v562 = vperm.slane %v472, %v274
    %v563 = vsel %vm283, %v556, %v555
    %v564 = vsel %vm285, %v557, %v563
    %v565 = vsel %vm287, %v558, %v564
    %v566 = vsel %vm289, %v559, %v565
    %v567 = vsel %vm291, %v560, %v566
    %v568 = vsel %vm293, %v561, %v567
    %v569 = vsel %vm295, %v562, %v568
    %571 = vst.msk [vmem:[#allocation11] sm:$0xff] %vm298, %v569
    // Predicated region
    $region42: #{tpu_custom_call.1} parent=1 // pred_check
      _
    $region43: #{tpu_custom_call.1} parent=1 // pred_check_branch
      %573 = sbr.rel (0) target = $region45
    $region44: #{tpu_custom_call.1} parent=1 // pred_region
      %575 = vsyncadd [#allocation4], 0
      %s577 = sshll.u32 [#allocation10], 4
      %s578 = int_to_ptr.vmem [resolvable:$true] %s577
      %s579 = sshll.u32 %s6, 4
      %s580 = int_to_ptr.hbm [resolvable:$true] %s579
      %582 = dma.vmem_to_hbm [thread:$0]  %s578, 128, %s580, [#allocation4]
    $region45: #{tpu_custom_call.1} parent=1 // pred_fallthru
      _
    // Predicated region
    $region46: #{tpu_custom_call.1} parent=1 // pred_check
      _
    $region47: #{tpu_custom_call.1} parent=1 // pred_check_branch
      %584 = sbr.rel (0) target = $region49
    $region48: #{tpu_custom_call.1} parent=1 // pred_region
      %586 = vsyncadd [#allocation12], 0
      %s588 = sshll.u32 [#allocation11], 4
      %s589 = int_to_ptr.vmem [resolvable:$true] %s588
      %s590 = sshll.u32 %s7, 4
      %s591 = int_to_ptr.hbm [resolvable:$true] %s590
      %593 = dma.vmem_to_hbm [thread:$0]  %s589, 128, %s591, [#allocation12]
    $region49: #{tpu_custom_call.1} parent=1 // pred_fallthru
      _
    // Predicated region
    $region50: #{tpu_custom_call.1} parent=1 // pred_check
      _
    $region51: #{tpu_custom_call.1} parent=1 // pred_check_branch
      %595 = sbr.rel (0) target = $region53
    $region52: #{tpu_custom_call.1} parent=1 // pred_region
      %597 = dma.done [#allocation4], 128
    $region53: #{tpu_custom_call.1} parent=1 // pred_fallthru
      _
    // Predicated region
    $region54: #{tpu_custom_call.1} parent=1 // pred_check
      _
    $region55: #{tpu_custom_call.1} parent=1 // pred_check_branch
      %599 = sbr.rel (0) target = $region57
    $region56: #{tpu_custom_call.1} parent=1 // pred_region
      %601 = dma.done [#allocation12], 128
    $region57: #{tpu_custom_call.1} parent=1 // pred_fallthru
      _
    %602 = vsyncpa [#allocation3], 1
    %603 = vsyncpa [#allocation6], 1
    %604 = vsyncpa [#allocation9], 1
    %605 = vsyncpa [#allocation4], 1
    %606 = vsyncpa [#allocation12], 1

</llo_original>
